<compile_context>
chip_gen: v6e
topology: v6e:2x2x1
jax: 0.10.0
libtpu: 0.0.40
codegen_flags: <defaults>
</compile_context>

<pallas_src>
import jax
import jax.numpy as jnp
from jax.experimental import pallas as pl
from jax.experimental.pallas import tpu as pltpu


def recsys_kernel(u_ref, m_ref, w_ref, b_ref, out_ref):
    """One TB-wide batch tile per grid step.

    u_ref   : VMEM f32 [F, TB]   user embedding rows (batch on lanes)
    m_ref   : VMEM f32 [F, TB]   movie embedding rows (batch on lanes)
    w_ref   : VMEM f32 [F, 2]    fc weight, col 0 = user half, col 1 = movie half
    b_ref   : SMEM f32 [1, 1]    fc bias (scalar)
    out_ref : VMEM f32 [1, TB]   lane-dense output tile
    """
    w = w_ref[...]                                                  # (F, 2)
    # cat([u, m]) @ W.T  ==  sum_f( u*w_user + m*w_movie )   (VPU mul/add + XLU reduce)
    acc = u_ref[...] * w[:, 0:1] + m_ref[...] * w[:, 1:2]           # (F, TB)
    logit = jnp.sum(acc, axis=0, keepdims=True) + b_ref[0, 0]       # (1, TB)
    out_ref[...] = (5.0 * jax.nn.sigmoid(logit)).astype(out_ref.dtype)


def recsys_forward(user_ids, movie_ids, params, *, tb=128):
    uemb = params["user_emb"]          # [n_users, F]
    memb = params["movie_emb"]         # [n_movies, F]
    w = params["w"]                    # [1, 2F]  (PyTorch fc.weight layout)
    b = params["b"]                    # [1]

    B = user_ids.shape[0]
    F = uemb.shape[1]

    # Guard against OOB rows before any dynamic gather.
    uid = jnp.clip(user_ids.astype(jnp.int32), 0, uemb.shape[0] - 1)
    mid = jnp.clip(movie_ids.astype(jnp.int32), 0, memb.shape[0] - 1)

    # Pad the batch up to a multiple of the tile so every tile is full / lane-dense.
    n_tiles = pl.cdiv(B, tb)
    b_pad = n_tiles * tb
    uid_p = jnp.pad(uid, (0, b_pad - B))
    mid_p = jnp.pad(mid, (0, b_pad - B))

    # Dense gather in the wrapper (perf-review option (b)); present feature on
    # sublanes, batch on lanes so the kernel works on fully packed vregs.
    u_t = jnp.take(uemb, uid_p, axis=0).T.astype(jnp.float32)       # [F, B_pad]
    m_t = jnp.take(memb, mid_p, axis=0).T.astype(jnp.float32)       # [F, B_pad]

    # fc.weight [1, 2F] -> [F, 2]: col 0 = user half, col 1 = movie half.
    w_fc = w.reshape(2, F).T.astype(jnp.float32)                    # [F, 2]
    b_sc = b.reshape(1, 1).astype(jnp.float32)                      # [1, 1] (SMEM)

    grid_spec = pltpu.PrefetchScalarGridSpec(
        num_scalar_prefetch=0,
        grid=(n_tiles,),
        in_specs=[
            pl.BlockSpec((F, tb), lambda i: (0, i)),                 # user slab tile
            pl.BlockSpec((F, tb), lambda i: (0, i)),                 # movie slab tile
            pl.BlockSpec((F, 2), lambda i: (0, 0)),                  # weight, VMEM-resident
            pl.BlockSpec(memory_space=pltpu.MemorySpace.SMEM),       # bias scalar
        ],
        # Lane-dense [1, TB] output tile per step.
        out_specs=pl.BlockSpec((1, tb), lambda i: (0, i)),
    )

    out = pl.pallas_call(
        recsys_kernel,
        out_shape=jax.ShapeDtypeStruct((1, b_pad), jnp.float32),
        grid_spec=grid_spec,
        compiler_params=pltpu.CompilerParams(
            # Each step writes a distinct output tile -> batch axis is parallel
            # (2 TensorCores on v7x; no-op on v5e/v6e).
            dimension_semantics=("parallel",),
            # Honest budget: double-buffered tiles are only a few hundred KiB.
            vmem_limit_bytes=8 * 1024 * 1024,
        ),
    )(u_t, m_t, w_fc, b_sc)

    return out[0, :B].reshape(B, 1)


def init_params(key, n_users, n_movies, n_factors):
    k1, k2, k3, k4 = jax.random.split(key, 4)
    # nn.Embedding default init ~ N(0,1); nn.Linear ~ U(-1/sqrt(in), 1/sqrt(in))
    bound = 1.0 / jnp.sqrt(jnp.float32(2 * n_factors))
    return {
        "user_emb": jax.random.normal(k1, (n_users, n_factors), jnp.float32),
        "movie_emb": jax.random.normal(k2, (n_movies, n_factors), jnp.float32),
        "w": jax.random.uniform(k3, (1, 2 * n_factors), jnp.float32, -bound, bound),
        "b": jax.random.uniform(k4, (1,), jnp.float32, -bound, bound),
    }


def reference_forward(user_ids, movie_ids, params):
    u = params["user_emb"][user_ids]              # [B, F]
    m = params["movie_emb"][movie_ids]            # [B, F]
    x = jnp.concatenate([u, m], axis=1)           # [B, 2F]
    logits = x @ params["w"].T + params["b"]      # [B, 1]
    return jax.nn.sigmoid(logits) * 5.0


if __name__ == "__main__":
    n_users, n_movies, n_factors = 10, 12, 32
    batch = 8

    key = jax.random.PRNGKey(0)
    kp, ku, km = jax.random.split(key, 3)
    params = init_params(kp, n_users, n_movies, n_factors)

    user_ids = jax.random.randint(ku, (batch,), 0, n_users, dtype=jnp.int32)
    movie_ids = jax.random.randint(km, (batch,), 0, n_movies, dtype=jnp.int32)

    out = recsys_forward(user_ids, movie_ids, params)
    out = jax.block_until_ready(out)

    ref = reference_forward(user_ids, movie_ids, params)
    assert out.shape == (batch, 1), out.shape
    assert jnp.allclose(out, ref, atol=1e-5, rtol=1e-5), (out, ref)

    print("KERNEL_OK")
</pallas_src>

<mosaic_0001>
module attributes {stable_mosaic.version = 11 : i64} {
  func.func @recsys_kernel(%arg0: i32, %arg1: memref<32x128xf32, #tpu.memory_space<vmem>>, %arg2: memref<32x128xf32, #tpu.memory_space<vmem>>, %arg3: memref<32x2xf32, #tpu.memory_space<vmem>>, %arg4: memref<1x1xf32, #tpu.memory_space<smem>>, %arg5: memref<1x128xf32, #tpu.memory_space<vmem>>) attributes {dimension_semantics = [#tpu.dimension_semantics<parallel>], iteration_bounds = array<i64: 1>, scalar_prefetch = 0 : i64, scratch_operands = 0 : i64, tpu.core_type = #tpu.core_type<tc>, window_params = [{transform_indices = @transform_0, window_bounds = array<i64: 32, 128>}, {transform_indices = @transform_1, window_bounds = array<i64: 32, 128>}, {pipeline_mode = #tpu.pipeline_mode<synchronous>, transform_indices = @transform_2, window_bounds = array<i64: 32, 2>}, {transform_indices = @transform_3, window_bounds = array<i64: 1, 1>}, {transform_indices = @transform_4, window_bounds = array<i64: 1, 128>}]} {
    %c0 = arith.constant 0 : index
    %c0_0 = arith.constant 0 : index
    %0 = vector.load %arg3[%c0, %c0_0] : memref<32x2xf32, #tpu.memory_space<vmem>>, vector<32x2xf32>
    %c0_1 = arith.constant 0 : index
    %c0_2 = arith.constant 0 : index
    %1 = vector.load %arg1[%c0_1, %c0_2] : memref<32x128xf32, #tpu.memory_space<vmem>>, vector<32x128xf32>
    %2 = vector.extract_strided_slice %0 {offsets = [0, 0], sizes = [32, 1], strides = [1, 1]} : vector<32x2xf32> to vector<32x1xf32>
    %3 = vector.broadcast %2 : vector<32x1xf32> to vector<32x128xf32>
    %4 = arith.mulf %1, %3 : vector<32x128xf32>
    %c0_3 = arith.constant 0 : index
    %c0_4 = arith.constant 0 : index
    %5 = vector.load %arg2[%c0_3, %c0_4] : memref<32x128xf32, #tpu.memory_space<vmem>>, vector<32x128xf32>
    %6 = vector.extract_strided_slice %0 {offsets = [0, 1], sizes = [32, 1], strides = [1, 1]} : vector<32x2xf32> to vector<32x1xf32>
    %7 = vector.broadcast %6 : vector<32x1xf32> to vector<32x128xf32>
    %8 = arith.mulf %5, %7 : vector<32x128xf32>
    %9 = arith.addf %4, %8 : vector<32x128xf32>
    %cst = arith.constant dense<0.000000e+00> : vector<128xf32>
    %10 = vector.multi_reduction <add>, %9, %cst [0] : vector<32x128xf32> to vector<128xf32>
    %11 = vector.shape_cast %10 : vector<128xf32> to vector<1x128xf32>
    %c0_5 = arith.constant 0 : index
    %c0_6 = arith.constant 0 : index
    %12 = memref.load %arg4[%c0_5, %c0_6] : memref<1x1xf32, #tpu.memory_space<smem>>
    %13 = vector.broadcast %12 : f32 to vector<1x128xf32>
    %14 = arith.addf %11, %13 : vector<1x128xf32>
    %15 = arith.negf %14 : vector<1x128xf32>
    %16 = math.exp %15 : vector<1x128xf32>
    %cst_7 = arith.constant 1.000000e+00 : f32
    %17 = vector.broadcast %cst_7 : f32 to vector<1x128xf32>
    %18 = arith.addf %17, %16 : vector<1x128xf32>
    %19 = arith.divf %17, %18 : vector<1x128xf32>
    %cst_8 = arith.constant 5.000000e+00 : f32
    %20 = vector.broadcast %cst_8 : f32 to vector<1x128xf32>
    %21 = arith.mulf %20, %19 : vector<1x128xf32>
    %c0_9 = arith.constant 0 : index
    %c0_10 = arith.constant 0 : index
    %22 = vector.load %arg5[%c0_9, %c0_10] : memref<1x128xf32, #tpu.memory_space<vmem>>, vector<1x128xf32>
    tpu.vector_store %arg5[%c0_9, %c0_10], %21 {strides = array<i32>} : memref<1x128xf32, #tpu.memory_space<vmem>>, vector<1x128xf32>,
    return
  }
  func.func @transform_0(%arg0: i32) -> (i32, i32) {
    %c0_i32 = arith.constant 0 : i32
    %c0_i32_0 = arith.constant 0 : i32
    return %c0_i32, %arg0 : i32, i32
  }
  func.func @transform_1(%arg0: i32) -> (i32, i32) {
    %c0_i32 = arith.constant 0 : i32
    %c0_i32_0 = arith.constant 0 : i32
    return %c0_i32, %arg0 : i32, i32
  }
  func.func @transform_2(%arg0: i32) -> (i32, i32) {
    %c0_i32 = arith.constant 0 : i32
    %c0_i32_0 = arith.constant 0 : i32
    %c0_i32_1 = arith.constant 0 : i32
    return %c0_i32, %c0_i32_0 : i32, i32
  }
  func.func @transform_3(%arg0: i32) -> (i32, i32) {
    %c0_i32 = arith.constant 0 : i32
    %c0_i32_0 = arith.constant 0 : i32
    %c0_i32_1 = arith.constant 0 : i32
    return %c0_i32, %c0_i32_0 : i32, i32
  }
  func.func @transform_4(%arg0: i32) -> (i32, i32) {
    %c0_i32 = arith.constant 0 : i32
    %c0_i32_0 = arith.constant 0 : i32
    return %c0_i32, %arg0 : i32, i32
  }
}

</mosaic_0001>

<llo_original>
// kernel: tpu_custom_call.1
$region0: #{tpu_custom_call.1}
  #allocation0 [shape = 'u32[]', space=smem, size = 0x4, offset = 0x4, fixed_abs, tag = 'smem constant byte address 0x4 - core index']
  #allocation1 [shape = 'u32[144,128]{1,0:T(1,128)}', space=vmem, size = 0x12000, scoped, tag = 'internal scratch']
  #allocation2 [shape = 'f32[1,1]{1,0:T(1,128)S(6)}', space=smem, size = 0x200, scoped, tag = 'scoped memory for tpu_custom_call.1']
  %s0 = inlined_call_operand.vmem [shape: f32[32,128], index: 0, kind: input, shape index: {}]
  %s1 = inlined_call_operand.hbm [shape: f32[32,128], index: 1, kind: input, shape index: {}]
  %s2 = inlined_call_operand.vmem [shape: f32[32,2], index: 2, kind: input, shape index: {}]
  %s3 = inlined_call_operand.<no memory space> [shape: f32[1,1], index: 3, kind: input, shape index: {}]
  %s4 = inlined_call_operand.hbm [shape: f32[1,128], index: 4, kind: output, shape index: {}]
  %s5 = sld [smem:[#allocation0]]
  $region30: #{tpu_custom_call.1} parent=0
    _
  %s7 = ssub.s32 1, %s5
  %s8 = scalar_select 0, %s7, %s5
  %9 = sst [smem:[#allocation2]] %s3
  $region1: #{tpu_custom_call.1} parent=0
    #allocation3 [shape = 'u8[16384]{0}', space=vmem, size = 0x4000, scoped, tag = 'input window, operand 1, single buffered']
    #allocation4 [shape = 's32[1]{0}', space=sflag, size = 0x4, scoped, tag = 'scoped memory for tpu_custom_call.1']
    #allocation5 [shape = 's32[1]{0}', space=sflag, size = 0x4, scoped, tag = 'scoped memory for tpu_custom_call.1']
    #allocation6 [shape = 'u8[512]{0}', space=vmem, size = 0x400, scoped, tag = 'output window, operand 0, single buffered']
    %10 = vsyncpa [#allocation4], 0
    %11 = vsyncpa [#allocation5], 0
    // Predicated region
    $region2: #{tpu_custom_call.1} parent=1 // pred_check
      _
    $region3: #{tpu_custom_call.1} parent=1 // pred_check_branch
      %13 = sbr.rel (0) target = $region5
    $region4: #{tpu_custom_call.1} parent=1 // pred_region
      _
    $region5: #{tpu_custom_call.1} parent=1 // pred_fallthru
      _
    // Predicated region
    $region6: #{tpu_custom_call.1} parent=1 // pred_check
      _
    $region7: #{tpu_custom_call.1} parent=1 // pred_check_branch
      %15 = sbr.rel (0) target = $region9
    $region8: #{tpu_custom_call.1} parent=1 // pred_region
      %s17 = ssub.s32 512, 512
      %18 = vsyncadd [#allocation4], %s17
      %s19 = sshll.u32 [#allocation3], 4
      %s20 = int_to_ptr.vmem [resolvable:$true] %s19
      %25 = dma.hbm_to_vmem [thread:$0]  %s1, 512, %s20, [#allocation4], 128, 128, 8
    $region9: #{tpu_custom_call.1} parent=1 // pred_fallthru
      _
    // Predicated region
    $region10: #{tpu_custom_call.1} parent=1 // pred_check
      _
    $region11: #{tpu_custom_call.1} parent=1 // pred_check_branch
      %27 = sbr.rel (0) target = $region13
    $region12: #{tpu_custom_call.1} parent=1 // pred_region
      _
    $region13: #{tpu_custom_call.1} parent=1 // pred_fallthru
      _
    // Predicated region
    $region14: #{tpu_custom_call.1} parent=1 // pred_check
      _
    $region15: #{tpu_custom_call.1} parent=1 // pred_check_branch
      %29 = sbr.rel (0) target = $region17
    $region16: #{tpu_custom_call.1} parent=1 // pred_region
      _
    $region17: #{tpu_custom_call.1} parent=1 // pred_fallthru
      _
    // Predicated region
    $region18: #{tpu_custom_call.1} parent=1 // pred_check
      _
    $region19: #{tpu_custom_call.1} parent=1 // pred_check_branch
      %31 = sbr.rel (0) target = $region21
    $region20: #{tpu_custom_call.1} parent=1 // pred_region
      %32 = dma.done [#allocation4], 512
    $region21: #{tpu_custom_call.1} parent=1 // pred_fallthru
      _
    %v33 = vld [vmem:[%s2] sm:$0xff]
    %v34 = vld [vmem:[%s2 + $0x8] sm:$0xff]
    %v35 = vld [vmem:[%s2 + $0x10] sm:$0xff]
    %v36 = vld [vmem:[%s2 + $0x18] sm:$0xff]
    %v37 = vld [vmem:[%s0] sm:$0xff]
    %v38 = vld [vmem:[%s0 + $0x8] sm:$0xff]
    %v39 = vld [vmem:[%s0 + $0x10] sm:$0xff]
    %v40 = vld [vmem:[%s0 + $0x18] sm:$0xff]
    %42 = vset.pattern.permute.xlu0 0
    %43 = vperm.xlu0 %42, %v33
    %v44 = vpop.permute.xlu0 %43
    %47 = vset.pattern.permute.xlu0 0
    %48 = vperm.xlu0 %47, %v34
    %v49 = vpop.permute.xlu0 %48
    %52 = vset.pattern.permute.xlu0 0
    %53 = vperm.xlu0 %52, %v35
    %v54 = vpop.permute.xlu0 %53
    %57 = vset.pattern.permute.xlu0 0
    %58 = vperm.xlu0 %57, %v36
    %v59 = vpop.permute.xlu0 %58
    %v61 = vmul.f32 %v37, %v44
    %v62 = vmul.f32 %v38, %v49
    %v63 = vmul.f32 %v39, %v54
    %v64 = vmul.f32 %v40, %v59
    %v65 = vld [vmem:[#allocation3] sm:$0xff]
    %v66 = vld [vmem:[#allocation3 + $0x8] sm:$0xff]
    %v67 = vld [vmem:[#allocation3 + $0x10] sm:$0xff]
    %v68 = vld [vmem:[#allocation3 + $0x18] sm:$0xff]
    %69 = vset.pattern.permute.xlu0 1
    %70 = vperm.xlu0 %69, %v33
    %v71 = vpop.permute.xlu0 %70
    %73 = vset.pattern.permute.xlu0 1
    %74 = vperm.xlu0 %73, %v34
    %v75 = vpop.permute.xlu0 %74
    %77 = vset.pattern.permute.xlu0 1
    %78 = vperm.xlu0 %77, %v35
    %v79 = vpop.permute.xlu0 %78
    %81 = vset.pattern.permute.xlu0 1
    %82 = vperm.xlu0 %81, %v36
    %v83 = vpop.permute.xlu0 %82
    %v85 = vmul.f32 %v65, %v71
    %v86 = vmul.f32 %v66, %v75
    %v87 = vmul.f32 %v67, %v79
    %v88 = vmul.f32 %v68, %v83
    %v89 = vadd.f32 %v61, %v85
    %v90 = vadd.f32 %v62, %v86
    %v91 = vadd.f32 %v63, %v87
    %v92 = vadd.f32 %v64, %v88
    %v93 = vadd.f32 %v89, %v90
    %v94 = vadd.f32 %v93, %v91
    %v95 = vadd.f32 %v94, %v92
    %v96 = vrot.slane %v95, 4
    %v97 = vadd.f32 %v95, %v96
    %v98 = vrot.slane %v97, 2
    %v99 = vadd.f32 %v97, %v98
    %v100 = vrot.slane %v99, 1
    %v101 = vadd.f32 %v99, %v100
    %s102 = sld [smem:[#allocation2]]
    %v103 = vstv %s102
    %v104 = vadd.f32 %v101, %v103
    %v105 = vxor.u32 %v104, 2147483648
    %v106 = vmul.f32 %v105, 1.442695
    %v107 = vpow.pop %v106
    %v108 = vadd.f32 %v107, 1.0
    %v109 = vrcp.pop %v108
    %v110 = vmul.f32 1.0, %v109
    %v111 = vmul.f32 %v110, 5.0
    %112 = vst [vmem:[#allocation6] sm:$0x1] %v111
    // Predicated region
    $region22: #{tpu_custom_call.1} parent=1 // pred_check
      _
    $region23: #{tpu_custom_call.1} parent=1 // pred_check_branch
      %114 = sbr.rel (0) target = $region25
    $region24: #{tpu_custom_call.1} parent=1 // pred_region
      %s116 = ssub.s32 16, 16
      %117 = vsyncadd [#allocation5], %s116
      %s119 = sshll.u32 [#allocation6], 4
      %s120 = int_to_ptr.vmem [resolvable:$true] %s119
      %122 = dma.vmem_to_hbm [thread:$0]  %s120, 16, %s4, [#allocation5]
    $region25: #{tpu_custom_call.1} parent=1 // pred_fallthru
      _
    // Predicated region
    $region26: #{tpu_custom_call.1} parent=1 // pred_check
      _
    $region27: #{tpu_custom_call.1} parent=1 // pred_check_branch
      %124 = sbr.rel (0) target = $region29
    $region28: #{tpu_custom_call.1} parent=1 // pred_region
      %125 = dma.done [#allocation5], 16
    $region29: #{tpu_custom_call.1} parent=1 // pred_fallthru
      _
    %126 = vsyncpa [#allocation4], 1
    %127 = vsyncpa [#allocation5], 1

</llo_original>
